<compile_context>
chip_gen: v5e
topology: v5e:2x2
jax: 0.10.0
libtpu: 0.0.40
codegen_flags: <defaults>
</compile_context>

<pallas_src>
import functools

import jax
import jax.numpy as jnp
from jax.experimental import pallas as pl
from jax.experimental.pallas import tpu as pltpu


def _round_up(x, m):
    return (x + m - 1) // m * m


def _preferred_contract_align():
    """MXU contraction depth: 128 on v2-v5, 256 on v6e/v7x (128 always legal)."""
    try:
        kind = jax.devices()[0].device_kind.lower()
    except Exception:
        return 128
    for old in ("v2", "v3", "v4", "v5"):
        if old in kind:
            return 128
    return 256


def _vmem_capacity_bytes():
    try:
        cap = pltpu.get_tpu_info().vmem_capacity_bytes
        if cap:
            return int(cap)
    except Exception:
        pass
    return 64 * 1024 * 1024   # conservative: v7x per-TensorCore VMEM


def _supcon_kernel(q_ref, k_ref, lab_q_ref, lab_k_ref, out_ref,
                   qs_sc, m_sc, l_sc, pos_dot_sc, pos_cnt_sc,
                   *, inv_temperature, loss_scale, n_valid,
                   block_q, block_k, k_resident):
    """One (row tile i, col tile j) step of the online SupCon reduction.

    q_ref     : [TQ, Dp]            bf16 anchor feature tile (resident over j)
    k_ref     : [TK, Dp] or [Np,Dp] bf16 contrast features (tiled or resident)
    lab_q_ref : [TQ, 1]  int32 row labels ; lab_k_ref : [1, TK] int32 col labels
    out_ref   : [TQ, 1]  f32 per-anchor loss (written on the last col tile)
    qs_sc     : [TQ, Dp] bf16 temperature-scaled anchor tile
    m/l/pos_* : [TQ, 1]  f32 online accumulators
    """
    i = pl.program_id(0)
    j = pl.program_id(1)

    @pl.when(j == 0)
    def _init():
        # Hoist the 1/temperature multiply off the [TQ,TK] tile: scale the
        # anchor tile once per row tile (O(TQ*Dp) instead of O(TQ*TK) per step).
        qs_sc[...] = (q_ref[...].astype(jnp.float32)
                      * inv_temperature).astype(qs_sc.dtype)
        m_sc[...] = jnp.full_like(m_sc, -jnp.inf)
        l_sc[...] = jnp.zeros_like(l_sc)
        pos_dot_sc[...] = jnp.zeros_like(pos_dot_sc)
        pos_cnt_sc[...] = jnp.zeros_like(pos_cnt_sc)

    if k_resident:
        col0 = pl.multiple_of(j * block_k, block_k)
        k_tile = k_ref[pl.ds(col0, block_k), :]
    else:
        k_tile = k_ref[...]

    # Scaled logits tile on the MXU, f32 accumulation (contract last dims; same
    # pattern as the reference flash kernel, no explicit transpose needed).
    s = jax.lax.dot_general(
        qs_sc[...], k_tile,
        dimension_numbers=(((1,), (1,)), ((), ())),
        preferred_element_type=jnp.float32)                    # [TQ, TK]

    label_eq = lab_q_ref[...] == lab_k_ref[...]                # [TQ, TK] bool

    # Online max / LSE shift.  The shift need not be the true masked max (it
    # cancels exactly in logZ), matching the torch reference which also maxes
    # over the full row including the self logit.
    m_prev = m_sc[...]
    m_new = jnp.maximum(m_prev, jnp.max(s, axis=1, keepdims=True))
    alpha = jnp.exp(m_prev - m_new)
    m_sc[...] = m_new

    row0 = i * block_q
    # Tile needs masking iff it touches the diagonal (self-contrast) or
    # contains padded columns.  Interior tiles take the mask-free path.
    touches_diag = jnp.logical_and(j * block_k < row0 + block_q,
                                   row0 < (j + 1) * block_k)
    has_pad_cols = (j + 1) * block_k > n_valid
    needs_mask = jnp.logical_or(touches_diag, has_pad_cols)

    @pl.when(jnp.logical_not(needs_mask))
    def _fast():
        p = jnp.exp(s - m_new)
        l_sc[...] = alpha * l_sc[...] + jnp.sum(p, axis=1, keepdims=True)
        pos_dot_sc[...] += jnp.sum(jnp.where(label_eq, s, 0.0),
                                   axis=1, keepdims=True)
        pos_cnt_sc[...] += jnp.sum(jnp.where(label_eq, 1.0, 0.0),
                                   axis=1, keepdims=True)

    @pl.when(needs_mask)
    def _masked():
        # Self-exclusion + padded-column masking from 1-D id vectors (one
        # broadcast compare; no full-tile int32 iotas).
        row_ids = row0 + jax.lax.broadcasted_iota(jnp.int32, (block_q, 1), 0)
        col_ids = (j * block_k
                   + jax.lax.broadcasted_iota(jnp.int32, (1, block_k), 1))
        keep = jnp.logical_and(row_ids != col_ids, col_ids < n_valid)
        p = jnp.where(keep, jnp.exp(s - m_new), 0.0)
        l_sc[...] = alpha * l_sc[...] + jnp.sum(p, axis=1, keepdims=True)
        pos = jnp.logical_and(label_eq, keep)
        pos_dot_sc[...] += jnp.sum(jnp.where(pos, s, 0.0), axis=1, keepdims=True)
        pos_cnt_sc[...] += jnp.sum(jnp.where(pos, 1.0, 0.0), axis=1, keepdims=True)

    @pl.when(j == pl.num_programs(1) - 1)
    def _finalize():
        log_z = m_sc[...] + jnp.log(l_sc[...])                 # [TQ, 1]
        cnt = pos_cnt_sc[...]
        # Exact divide: runs once per [TQ,1] row tile, approx buys nothing.
        # cnt == 0 (anchor with no positives) gives NaN, mirroring PyTorch.
        mean_log_prob_pos = pos_dot_sc[...] / cnt - log_z
        out_ref[...] = -loss_scale * mean_log_prob_pos


def supcon_loss(features, labels=None, mask=None,
                temperature=0.07, contrast_mode='all', base_temperature=0.07,
                block_q=512, block_k=512, matmul_dtype=jnp.bfloat16,
                k_resident=None):
    """JAX/Pallas equivalent of SupConLoss.forward (contrast_mode='all')."""
    if features.ndim < 3:
        raise ValueError('`features` needs to be [bsz, n_views, ...]')
    if features.ndim > 3:
        features = features.reshape(features.shape[0], features.shape[1], -1)
    if contrast_mode != 'all':
        # TODO(synk): contrast_mode='one' (single anchor view) not implemented.
        raise ValueError('only contrast_mode="all" is implemented')

    bsz, n_views, dim = features.shape

    if labels is not None and mask is not None:
        raise ValueError('Cannot define both `labels` and `mask`')
    if mask is not None:
        # TODO(synk): arbitrary user [bsz,bsz] masks are not expressible as a
        # label compare; the label-based tiled kernel does not support them.
        raise NotImplementedError('explicit `mask` input is not supported')
    if labels is None:
        labels_b = jnp.arange(bsz, dtype=jnp.int32)   # SimCLR: eye(bsz) mask
    else:
        labels_b = labels.reshape(-1).astype(jnp.int32)
        if labels_b.shape[0] != bsz:
            raise ValueError('Num of labels does not match num of features')

    n = bsz * n_views
    # contrast_feature = cat(unbind(features, 1), 0)  -> view-major [N, D]
    cf = jnp.transpose(features, (1, 0, 2)).reshape(n, dim)
    lab = jnp.tile(labels_b, (n_views,))              # [N], view-major

    # Contracting-dim padding: 256-aligned on 256-deep MXUs when D > 128.
    d_pad = _round_up(dim, 128)
    if _preferred_contract_align() == 256 and dim > 128:
        d_pad = _round_up(dim, 256)

    # Tile sizes: (8,128)-aligned, shrink for small problems, and force
    # blk_q | blk_k so n_pad = round_up(n, blk_k) (no lcm padding blow-up).
    blk_k = min(_round_up(block_k, 128), _round_up(n, 128))
    blk_q = min(_round_up(block_q, 8), blk_k, _round_up(n, 8))
    while blk_k % blk_q != 0:
        blk_q -= 8
    n_pad = _round_up(n, blk_k)

    # VMEM sizing: decide whether the full contrast matrix can stay resident
    # (DMA'd once) and set the scoped-VMEM limit explicitly (v7x has only
    # 64 MiB per TensorCore, so don't blindly inherit v5e/v6e sizing).
    itemsize = jnp.dtype(matmul_dtype).itemsize
    vmem_budget = int(_vmem_capacity_bytes() * 0.85)
    common = (3 * blk_q * d_pad * itemsize        # q double-buffer + scaled-q scratch
              + 6 * blk_q * blk_k * 4             # live f32 [TQ,TK] temporaries
              + 16 * blk_q * 4 + (1 << 20))       # accumulators / out / slack
    need_resident = common + 2 * n_pad * d_pad * itemsize
    need_tiled = common + 2 * blk_k * d_pad * itemsize
    if k_resident is None:
        k_resident = need_resident <= vmem_budget
    vmem_need = need_resident if k_resident else need_tiled
    vmem_limit = int(min(vmem_budget, max(vmem_need, 32 * 1024 * 1024)))

    # Zero-pad features (bf16 for the MXU) and labels.  Padded columns are
    # masked in-kernel; padded rows are sliced off before the mean.
    cf_p = jnp.zeros((n_pad, d_pad), dtype=matmul_dtype)
    cf_p = cf_p.at[:n, :dim].set(cf.astype(matmul_dtype))
    lab_p = jnp.full((n_pad,), -1, dtype=jnp.int32).at[:n].set(lab)
    lab_col = lab_p.reshape(n_pad, 1)
    lab_row = lab_p.reshape(1, n_pad)

    grid = (n_pad // blk_q, n_pad // blk_k)
    if k_resident:
        k_spec = pl.BlockSpec((n_pad, d_pad), lambda i, j: (0, 0))  # DMA'd once
    else:
        k_spec = pl.BlockSpec((blk_k, d_pad), lambda i, j: (j, 0))

    kernel = functools.partial(
        _supcon_kernel,
        inv_temperature=1.0 / float(temperature),
        loss_scale=float(temperature) / float(base_temperature),
        n_valid=n, block_q=blk_q, block_k=blk_k, k_resident=bool(k_resident))

    k_stream = (n_pad * d_pad * itemsize if k_resident
                else grid[0] * n_pad * d_pad * itemsize)
    cost = pl.CostEstimate(
        flops=2 * n_pad * n_pad * d_pad,
        transcendentals=n_pad * n_pad,
        bytes_accessed=n_pad * d_pad * itemsize + k_stream + 3 * n_pad * 4)

    per_anchor = pl.pallas_call(
        kernel,
        out_shape=jax.ShapeDtypeStruct((n_pad, 1), jnp.float32),
        grid_spec=pltpu.PrefetchScalarGridSpec(
            num_scalar_prefetch=0,
            grid=grid,
            in_specs=[
                pl.BlockSpec((blk_q, d_pad), lambda i, j: (i, 0)),  # anchor rows
                k_spec,                                             # contrast cols
                pl.BlockSpec((blk_q, 1), lambda i, j: (i, 0)),      # row labels
                pl.BlockSpec((1, blk_k), lambda i, j: (0, j)),      # col labels
            ],
            out_specs=pl.BlockSpec((blk_q, 1), lambda i, j: (i, 0)),
            scratch_shapes=[pltpu.VMEM((blk_q, d_pad), matmul_dtype)]
                         + [pltpu.VMEM((blk_q, 1), jnp.float32)] * 4),
        compiler_params=pltpu.CompilerParams(
            dimension_semantics=("parallel", "arbitrary"),
            vmem_limit_bytes=vmem_limit),
        cost_estimate=cost,
    )(cf_p, cf_p, lab_col, lab_row)

    # loss.view(anchor_count, batch_size).mean() == mean over all N anchors.
    return jnp.mean(per_anchor[:n, 0])


def _supcon_loss_ref(features, labels, temperature=0.07, base_temperature=0.07,
                     matmul_dtype=jnp.bfloat16):
    """Pure-JAX reference mirroring the PyTorch code (contrast_mode='all').

    Uses the same bf16-input / f32-accumulate matmul precision as the kernel so
    the comparison isolates the kernel's tiling / online-LSE logic.
    """
    bsz, n_views, dim = features.shape
    n = bsz * n_views
    cf = jnp.transpose(features, (1, 0, 2)).reshape(n, dim).astype(matmul_dtype)
    logits = jax.lax.dot_general(cf, cf, (((1,), (1,)), ((), ())),
                                 preferred_element_type=jnp.float32) / temperature
    logits = logits - jnp.max(logits, axis=1, keepdims=True)
    labels = labels.reshape(-1, 1)
    mask = (labels == labels.T).astype(jnp.float32)
    mask = jnp.tile(mask, (n_views, n_views))
    logits_mask = 1.0 - jnp.eye(n, dtype=jnp.float32)
    mask = mask * logits_mask
    exp_logits = jnp.exp(logits) * logits_mask
    log_prob = logits - jnp.log(exp_logits.sum(1, keepdims=True))
    mean_log_prob_pos = (mask * log_prob).sum(1) / mask.sum(1)
    loss = -(temperature / base_temperature) * mean_log_prob_pos
    return loss.mean()


if __name__ == "__main__":
    key = jax.random.PRNGKey(0)
    k1, k2, k3, k4 = jax.random.split(key, 4)

    # Small shape (single column tile): exercises the masked path
    # (diagonal + padded columns) and the SimCLR branch.
    bsz, n_views, dim = 8, 2, 32
    feats = jax.random.normal(k1, (bsz, n_views, dim), dtype=jnp.float32)
    feats = feats / jnp.linalg.norm(feats, axis=-1, keepdims=True)
    labels = jax.random.randint(k2, (bsz,), 0, 3)

    loss = jax.block_until_ready(supcon_loss(feats, labels=labels))
    ref = _supcon_loss_ref(feats, labels)
    assert jnp.allclose(loss, ref, rtol=1e-2, atol=1e-2), (loss, ref)

    loss_u = jax.block_until_ready(supcon_loss(feats))          # labels=None
    ref_u = _supcon_loss_ref(feats, jnp.arange(bsz))
    assert jnp.allclose(loss_u, ref_u, rtol=1e-2, atol=1e-2), (loss_u, ref_u)

    # Multi-tile shape (grid 2x2, exact multiple of the tile): exercises the
    # mask-free interior fast path and the multi-step online log-sum-exp,
    # with both the resident-K and the tiled-K contrast BlockSpec variants.
    bsz2, dim2 = 128, 32
    feats2 = jax.random.normal(k3, (bsz2, n_views, dim2), dtype=jnp.float32)
    feats2 = feats2 / jnp.linalg.norm(feats2, axis=-1, keepdims=True)
    labels2 = jax.random.randint(k4, (bsz2,), 0, 5)
    ref2 = _supcon_loss_ref(feats2, labels2)
    loss2_res = jax.block_until_ready(
        supcon_loss(feats2, labels=labels2, block_q=128, block_k=128,
                    k_resident=True))
    loss2_tile = jax.block_until_ready(
        supcon_loss(feats2, labels=labels2, block_q=128, block_k=128,
                    k_resident=False))
    assert jnp.allclose(loss2_res, ref2, rtol=1e-2, atol=1e-2), (loss2_res, ref2)
    assert jnp.allclose(loss2_tile, ref2, rtol=1e-2, atol=1e-2), (loss2_tile, ref2)

    print("KERNEL_OK")
</pallas_src>

<mosaic_0001>
module attributes {stable_mosaic.version = 11 : i64} {
  func.func @_supcon_kernel(%arg0: i32, %arg1: i32, %arg2: memref<16x128xbf16, #tpu.memory_space<vmem>>, %arg3: memref<128x128xbf16, #tpu.memory_space<vmem>>, %arg4: memref<16x1xi32, #tpu.memory_space<vmem>>, %arg5: memref<1x128xi32, #tpu.memory_space<vmem>>, %arg6: memref<16x1xf32, #tpu.memory_space<vmem>>, %arg7: memref<16x128xbf16, #tpu.memory_space<vmem>>, %arg8: memref<16x1xf32, #tpu.memory_space<vmem>>, %arg9: memref<16x1xf32, #tpu.memory_space<vmem>>, %arg10: memref<16x1xf32, #tpu.memory_space<vmem>>, %arg11: memref<16x1xf32, #tpu.memory_space<vmem>>) attributes {dimension_semantics = [#tpu.dimension_semantics<parallel>, #tpu.dimension_semantics<arbitrary>], iteration_bounds = array<i64: 8, 1>, scalar_prefetch = 0 : i64, scratch_operands = 5 : i64, tpu.core_type = #tpu.core_type<tc>, window_params = [{transform_indices = @transform_0, window_bounds = array<i64: 16, 128>}, {pipeline_mode = #tpu.pipeline_mode<synchronous>, transform_indices = @transform_1, window_bounds = array<i64: 128, 128>}, {transform_indices = @transform_2, window_bounds = array<i64: 16, 1>}, {transform_indices = @transform_3, window_bounds = array<i64: 1, 128>}, {transform_indices = @transform_4, window_bounds = array<i64: 16, 1>}]} {
    %c0_i32 = arith.constant 0 : i32
    %0 = arith.cmpi eq, %arg1, %c0_i32 : i32
    %1 = arith.extui %0 : i1 to i32
    %c0_i32_0 = arith.constant 0 : i32
    %2 = arith.cmpi ne, %1, %c0_i32_0 : i32
    scf.if %2 {
      %c0_22 = arith.constant 0 : index
      %c0_23 = arith.constant 0 : index
      %41 = vector.load %arg2[%c0_22, %c0_23] : memref<16x128xbf16, #tpu.memory_space<vmem>>, vector<16x128xbf16>
      %42 = arith.extf %41 : vector<16x128xbf16> to vector<16x128xf32>
      %cst_24 = arith.constant 14.2857141 : f32
      %43 = vector.broadcast %cst_24 : f32 to vector<16x128xf32>
      %44 = arith.mulf %42, %43 : vector<16x128xf32>
      %45 = arith.truncf %44 : vector<16x128xf32> to vector<16x128xbf16>
      %c0_25 = arith.constant 0 : index
      %c0_26 = arith.constant 0 : index
      %46 = vector.load %arg7[%c0_25, %c0_26] : memref<16x128xbf16, #tpu.memory_space<vmem>>, vector<16x128xbf16>
      tpu.vector_store %arg7[%c0_25, %c0_26], %45 {strides = array<i32>} : memref<16x128xbf16, #tpu.memory_space<vmem>>, vector<16x128xbf16>,
      %cst_27 = arith.constant 0xFF800000 : f32
      %47 = vector.broadcast %cst_27 : f32 to vector<16x1xf32>
      %c0_28 = arith.constant 0 : index
      %c0_29 = arith.constant 0 : index
      %48 = vector.load %arg8[%c0_28, %c0_29] : memref<16x1xf32, #tpu.memory_space<vmem>>, vector<16x1xf32>
      tpu.vector_store %arg8[%c0_28, %c0_29], %47 {strides = array<i32>} : memref<16x1xf32, #tpu.memory_space<vmem>>, vector<16x1xf32>,
      %cst_30 = arith.constant 0.000000e+00 : f32
      %49 = vector.broadcast %cst_30 : f32 to vector<16x1xf32>
      %c0_31 = arith.constant 0 : index
      %c0_32 = arith.constant 0 : index
      %50 = vector.load %arg9[%c0_31, %c0_32] : memref<16x1xf32, #tpu.memory_space<vmem>>, vector<16x1xf32>
      tpu.vector_store %arg9[%c0_31, %c0_32], %49 {strides = array<i32>} : memref<16x1xf32, #tpu.memory_space<vmem>>, vector<16x1xf32>,
      %cst_33 = arith.constant 0.000000e+00 : f32
      %51 = vector.broadcast %cst_33 : f32 to vector<16x1xf32>
      %c0_34 = arith.constant 0 : index
      %c0_35 = arith.constant 0 : index
      %52 = vector.load %arg10[%c0_34, %c0_35] : memref<16x1xf32, #tpu.memory_space<vmem>>, vector<16x1xf32>
      tpu.vector_store %arg10[%c0_34, %c0_35], %51 {strides = array<i32>} : memref<16x1xf32, #tpu.memory_space<vmem>>, vector<16x1xf32>,
      %cst_36 = arith.constant 0.000000e+00 : f32
      %53 = vector.broadcast %cst_36 : f32 to vector<16x1xf32>
      %c0_37 = arith.constant 0 : index
      %c0_38 = arith.constant 0 : index
      %54 = vector.load %arg11[%c0_37, %c0_38] : memref<16x1xf32, #tpu.memory_space<vmem>>, vector<16x1xf32>
      tpu.vector_store %arg11[%c0_37, %c0_38], %53 {strides = array<i32>} : memref<16x1xf32, #tpu.memory_space<vmem>>, vector<16x1xf32>,
    } else {
    }
    %c128_i32 = arith.constant 128 : i32
    %3 = arith.muli %arg1, %c128_i32 : i32
    %4 = tpu.assume_multiple %3, 128 : i32
    %5 = arith.index_cast %4 : i32 to index
    %c0 = arith.constant 0 : index
    %6 = vector.load %arg3[%5, %c0] : memref<128x128xbf16, #tpu.memory_space<vmem>>, vector<128x128xbf16>
    %c0_1 = arith.constant 0 : index
    %c0_2 = arith.constant 0 : index
    %7 = vector.load %arg7[%c0_1, %c0_2] : memref<16x128xbf16, #tpu.memory_space<vmem>>, vector<16x128xbf16>
    %cst = arith.constant dense<0.000000e+00> : vector<16x128xf32>
    %8 = tpu.matmul %7, %6, %cst {dimension_numbers = #tpu.dot_dimension_numbers<[1], [1], [0], [0], [0, 0, 1, 0], [], []>} : vector<16x128xbf16>, vector<128x128xbf16>, vector<16x128xf32> -> vector<16x128xf32>
    %c0_3 = arith.constant 0 : index
    %c0_4 = arith.constant 0 : index
    %9 = vector.load %arg4[%c0_3, %c0_4] : memref<16x1xi32, #tpu.memory_space<vmem>>, vector<16x1xi32>
    %c0_5 = arith.constant 0 : index
    %c0_6 = arith.constant 0 : index
    %10 = vector.load %arg5[%c0_5, %c0_6] : memref<1x128xi32, #tpu.memory_space<vmem>>, vector<1x128xi32>
    %11 = vector.broadcast %9 : vector<16x1xi32> to vector<16x128xi32>
    %12 = vector.broadcast %10 : vector<1x128xi32> to vector<16x128xi32>
    %13 = arith.cmpi eq, %11, %12 : vector<16x128xi32>
    %c0_7 = arith.constant 0 : index
    %c0_8 = arith.constant 0 : index
    %14 = vector.load %arg8[%c0_7, %c0_8] : memref<16x1xf32, #tpu.memory_space<vmem>>, vector<16x1xf32>
    %cst_9 = arith.constant dense<0xFF800000> : vector<16xf32>
    %15 = vector.multi_reduction <maximumf>, %8, %cst_9 [1] : vector<16x128xf32> to vector<16xf32>
    %16 = vector.shape_cast %15 : vector<16xf32> to vector<16x1xf32>
    %17 = arith.maximumf %14, %16 : vector<16x1xf32>
    %18 = arith.subf %14, %17 : vector<16x1xf32>
    %19 = math.exp %18 : vector<16x1xf32>
    %c0_10 = arith.constant 0 : index
    %c0_11 = arith.constant 0 : index
    %20 = vector.load %arg8[%c0_10, %c0_11] : memref<16x1xf32, #tpu.memory_space<vmem>>, vector<16x1xf32>
    tpu.vector_store %arg8[%c0_10, %c0_11], %17 {strides = array<i32>} : memref<16x1xf32, #tpu.memory_space<vmem>>, vector<16x1xf32>,
    %c16_i32 = arith.constant 16 : i32
    %21 = arith.muli %arg0, %c16_i32 : i32
    %c128_i32_12 = arith.constant 128 : i32
    %22 = arith.muli %arg1, %c128_i32_12 : i32
    %c16_i32_13 = arith.constant 16 : i32
    %23 = arith.addi %21, %c16_i32_13 : i32
    %24 = arith.cmpi slt, %22, %23 : i32
    %c1_i32 = arith.constant 1 : i32
    %25 = arith.addi %arg1, %c1_i32 : i32
    %c128_i32_14 = arith.constant 128 : i32
    %26 = arith.muli %25, %c128_i32_14 : i32
    %27 = arith.cmpi slt, %21, %26 : i32
    %28 = arith.andi %24, %27 : i1
    %c1_i32_15 = arith.constant 1 : i32
    %29 = arith.addi %arg1, %c1_i32_15 : i32
    %c128_i32_16 = arith.constant 128 : i32
    %30 = arith.muli %29, %c128_i32_16 : i32
    %c16_i32_17 = arith.constant 16 : i32
    %31 = arith.cmpi sgt, %30, %c16_i32_17 : i32
    %32 = arith.ori %28, %31 : i1
    %true = arith.constant true
    %33 = arith.xori %32, %true : i1
    %34 = arith.extui %33 : i1 to i32
    %c0_i32_18 = arith.constant 0 : i32
    %35 = arith.cmpi ne, %34, %c0_i32_18 : i32
    scf.if %35 {
      %41 = vector.broadcast %17 : vector<16x1xf32> to vector<16x128xf32>
      %42 = arith.subf %8, %41 : vector<16x128xf32>
      %43 = math.exp %42 : vector<16x128xf32>
      %c0_22 = arith.constant 0 : index
      %c0_23 = arith.constant 0 : index
      %44 = vector.load %arg9[%c0_22, %c0_23] : memref<16x1xf32, #tpu.memory_space<vmem>>, vector<16x1xf32>
      %45 = arith.mulf %19, %44 : vector<16x1xf32>
      %cst_24 = arith.constant dense<0.000000e+00> : vector<16xf32>
      %46 = vector.multi_reduction <add>, %43, %cst_24 [1] : vector<16x128xf32> to vector<16xf32>
      %47 = vector.shape_cast %46 : vector<16xf32> to vector<16x1xf32>
      %48 = arith.addf %45, %47 : vector<16x1xf32>
      %c0_25 = arith.constant 0 : index
      %c0_26 = arith.constant 0 : index
      %49 = vector.load %arg9[%c0_25, %c0_26] : memref<16x1xf32, #tpu.memory_space<vmem>>, vector<16x1xf32>
      tpu.vector_store %arg9[%c0_25, %c0_26], %48 {strides = array<i32>} : memref<16x1xf32, #tpu.memory_space<vmem>>, vector<16x1xf32>,
      %c0_27 = arith.constant 0 : index
      %c0_28 = arith.constant 0 : index
      %50 = vector.load %arg10[%c0_27, %c0_28] : memref<16x1xf32, #tpu.memory_space<vmem>>, vector<16x1xf32>
      %cst_29 = arith.constant 0.000000e+00 : f32
      %51 = vector.broadcast %cst_29 : f32 to vector<16x128xf32>
      %52 = arith.select %13, %8, %51 : vector<16x128xi1>, vector<16x128xf32>
      %cst_30 = arith.constant dense<0.000000e+00> : vector<16xf32>
      %53 = vector.multi_reduction <add>, %52, %cst_30 [1] : vector<16x128xf32> to vector<16xf32>
      %54 = vector.shape_cast %53 : vector<16xf32> to vector<16x1xf32>
      %55 = arith.addf %50, %54 : vector<16x1xf32>
      %c0_31 = arith.constant 0 : index
      %c0_32 = arith.constant 0 : index
      %56 = vector.load %arg10[%c0_31, %c0_32] : memref<16x1xf32, #tpu.memory_space<vmem>>, vector<16x1xf32>
      tpu.vector_store %arg10[%c0_31, %c0_32], %55 {strides = array<i32>} : memref<16x1xf32, #tpu.memory_space<vmem>>, vector<16x1xf32>,
      %c0_33 = arith.constant 0 : index
      %c0_34 = arith.constant 0 : index
      %57 = vector.load %arg11[%c0_33, %c0_34] : memref<16x1xf32, #tpu.memory_space<vmem>>, vector<16x1xf32>
      %cst_35 = arith.constant 1.000000e+00 : f32
      %cst_36 = arith.constant 0.000000e+00 : f32
      %58 = vector.broadcast %cst_35 : f32 to vector<16x128xf32>
      %59 = vector.broadcast %cst_36 : f32 to vector<16x128xf32>
      %60 = arith.select %13, %58, %59 : vector<16x128xi1>, vector<16x128xf32>
      %cst_37 = arith.constant dense<0.000000e+00> : vector<16xf32>
      %61 = vector.multi_reduction <add>, %60, %cst_37 [1] : vector<16x128xf32> to vector<16xf32>
      %62 = vector.shape_cast %61 : vector<16xf32> to vector<16x1xf32>
      %63 = arith.addf %57, %62 : vector<16x1xf32>
      %c0_38 = arith.constant 0 : index
      %c0_39 = arith.constant 0 : index
      %64 = vector.load %arg11[%c0_38, %c0_39] : memref<16x1xf32, #tpu.memory_space<vmem>>, vector<16x1xf32>
      tpu.vector_store %arg11[%c0_38, %c0_39], %63 {strides = array<i32>} : memref<16x1xf32, #tpu.memory_space<vmem>>, vector<16x1xf32>,
    } else {
    }
    %36 = arith.extui %32 : i1 to i32
    %c0_i32_19 = arith.constant 0 : i32
    %37 = arith.cmpi ne, %36, %c0_i32_19 : i32
    scf.if %37 {
      %41 = tpu.iota {dimensions = array<i32: 0>} : vector<16x1xi32>
      %42 = vector.broadcast %21 : i32 to vector<16x1xi32>
      %43 = arith.addi %42, %41 : vector<16x1xi32>
      %c128_i32_22 = arith.constant 128 : i32
      %44 = arith.muli %arg1, %c128_i32_22 : i32
      %45 = tpu.iota {dimensions = array<i32: 1>} : vector<1x128xi32>
      %46 = vector.broadcast %44 : i32 to vector<1x128xi32>
      %47 = arith.addi %46, %45 : vector<1x128xi32>
      %48 = vector.broadcast %43 : vector<16x1xi32> to vector<16x128xi32>
      %49 = vector.broadcast %47 : vector<1x128xi32> to vector<16x128xi32>
      %50 = arith.cmpi ne, %48, %49 : vector<16x128xi32>
      %c16_i32_23 = arith.constant 16 : i32
      %51 = vector.broadcast %c16_i32_23 : i32 to vector<1x128xi32>
      %52 = arith.cmpi slt, %47, %51 : vector<1x128xi32>
      %53 = vector.broadcast %52 : vector<1x128xi1> to vector<16x128xi1>
      %54 = arith.andi %50, %53 : vector<16x128xi1>
      %55 = vector.broadcast %17 : vector<16x1xf32> to vector<16x128xf32>
      %56 = arith.subf %8, %55 : vector<16x128xf32>
      %57 = math.exp %56 : vector<16x128xf32>
      %cst_24 = arith.constant 0.000000e+00 : f32
      %58 = vector.broadcast %cst_24 : f32 to vector<16x128xf32>
      %59 = arith.select %54, %57, %58 : vector<16x128xi1>, vector<16x128xf32>
      %c0_25 = arith.constant 0 : index
      %c0_26 = arith.constant 0 : index
      %60 = vector.load %arg9[%c0_25, %c0_26] : memref<16x1xf32, #tpu.memory_space<vmem>>, vector<16x1xf32>
      %61 = arith.mulf %19, %60 : vector<16x1xf32>
      %cst_27 = arith.constant dense<0.000000e+00> : vector<16xf32>
      %62 = vector.multi_reduction <add>, %59, %cst_27 [1] : vector<16x128xf32> to vector<16xf32>
      %63 = vector.shape_cast %62 : vector<16xf32> to vector<16x1xf32>
      %64 = arith.addf %61, %63 : vector<16x1xf32>
      %c0_28 = arith.constant 0 : index
      %c0_29 = arith.constant 0 : index
      %65 = vector.load %arg9[%c0_28, %c0_29] : memref<16x1xf32, #tpu.memory_space<vmem>>, vector<16x1xf32>
      tpu.vector_store %arg9[%c0_28, %c0_29], %64 {strides = array<i32>} : memref<16x1xf32, #tpu.memory_space<vmem>>, vector<16x1xf32>,
      %66 = arith.andi %13, %54 : vector<16x128xi1>
      %c0_30 = arith.constant 0 : index
      %c0_31 = arith.constant 0 : index
      %67 = vector.load %arg10[%c0_30, %c0_31] : memref<16x1xf32, #tpu.memory_space<vmem>>, vector<16x1xf32>
      %cst_32 = arith.constant 0.000000e+00 : f32
      %68 = vector.broadcast %cst_32 : f32 to vector<16x128xf32>
      %69 = arith.select %66, %8, %68 : vector<16x128xi1>, vector<16x128xf32>
      %cst_33 = arith.constant dense<0.000000e+00> : vector<16xf32>
      %70 = vector.multi_reduction <add>, %69, %cst_33 [1] : vector<16x128xf32> to vector<16xf32>
      %71 = vector.shape_cast %70 : vector<16xf32> to vector<16x1xf32>
      %72 = arith.addf %67, %71 : vector<16x1xf32>
      %c0_34 = arith.constant 0 : index
      %c0_35 = arith.constant 0 : index
      %73 = vector.load %arg10[%c0_34, %c0_35] : memref<16x1xf32, #tpu.memory_space<vmem>>, vector<16x1xf32>
      tpu.vector_store %arg10[%c0_34, %c0_35], %72 {strides = array<i32>} : memref<16x1xf32, #tpu.memory_space<vmem>>, vector<16x1xf32>,
      %c0_36 = arith.constant 0 : index
      %c0_37 = arith.constant 0 : index
      %74 = vector.load %arg11[%c0_36, %c0_37] : memref<16x1xf32, #tpu.memory_space<vmem>>, vector<16x1xf32>
      %cst_38 = arith.constant 1.000000e+00 : f32
      %cst_39 = arith.constant 0.000000e+00 : f32
      %75 = vector.broadcast %cst_38 : f32 to vector<16x128xf32>
      %76 = vector.broadcast %cst_39 : f32 to vector<16x128xf32>
      %77 = arith.select %66, %75, %76 : vector<16x128xi1>, vector<16x128xf32>
      %cst_40 = arith.constant dense<0.000000e+00> : vector<16xf32>
      %78 = vector.multi_reduction <add>, %77, %cst_40 [1] : vector<16x128xf32> to vector<16xf32>
      %79 = vector.shape_cast %78 : vector<16xf32> to vector<16x1xf32>
      %80 = arith.addf %74, %79 : vector<16x1xf32>
      %c0_41 = arith.constant 0 : index
      %c0_42 = arith.constant 0 : index
      %81 = vector.load %arg11[%c0_41, %c0_42] : memref<16x1xf32, #tpu.memory_space<vmem>>, vector<16x1xf32>
      tpu.vector_store %arg11[%c0_41, %c0_42], %80 {strides = array<i32>} : memref<16x1xf32, #tpu.memory_space<vmem>>, vector<16x1xf32>,
    } else {
    }
    %c0_i32_20 = arith.constant 0 : i32
    %38 = arith.cmpi eq, %arg1, %c0_i32_20 : i32
    %39 = arith.extui %38 : i1 to i32
    %c0_i32_21 = arith.constant 0 : i32
    %40 = arith.cmpi ne, %39, %c0_i32_21 : i32
    scf.if %40 {
      %c0_22 = arith.constant 0 : index
      %c0_23 = arith.constant 0 : index
      %41 = vector.load %arg8[%c0_22, %c0_23] : memref<16x1xf32, #tpu.memory_space<vmem>>, vector<16x1xf32>
      %c0_24 = arith.constant 0 : index
      %c0_25 = arith.constant 0 : index
      %42 = vector.load %arg9[%c0_24, %c0_25] : memref<16x1xf32, #tpu.memory_space<vmem>>, vector<16x1xf32>
      %43 = math.log %42 : vector<16x1xf32>
      %44 = arith.addf %41, %43 : vector<16x1xf32>
      %c0_26 = arith.constant 0 : index
      %c0_27 = arith.constant 0 : index
      %45 = vector.load %arg11[%c0_26, %c0_27] : memref<16x1xf32, #tpu.memory_space<vmem>>, vector<16x1xf32>
      %c0_28 = arith.constant 0 : index
      %c0_29 = arith.constant 0 : index
      %46 = vector.load %arg10[%c0_28, %c0_29] : memref<16x1xf32, #tpu.memory_space<vmem>>, vector<16x1xf32>
      %47 = arith.divf %46, %45 : vector<16x1xf32>
      %48 = arith.subf %47, %44 : vector<16x1xf32>
      %cst_30 = arith.constant -1.000000e+00 : f32
      %49 = vector.broadcast %cst_30 : f32 to vector<16x1xf32>
      %50 = arith.mulf %49, %48 : vector<16x1xf32>
      %c0_31 = arith.constant 0 : index
      %c0_32 = arith.constant 0 : index
      %51 = vector.load %arg6[%c0_31, %c0_32] : memref<16x1xf32, #tpu.memory_space<vmem>>, vector<16x1xf32>
      tpu.vector_store %arg6[%c0_31, %c0_32], %50 {strides = array<i32>} : memref<16x1xf32, #tpu.memory_space<vmem>>, vector<16x1xf32>,
    } else {
    }
    return
  }
  func.func @transform_0(%arg0: i32, %arg1: i32) -> (i32, i32) {
    %c0_i32 = arith.constant 0 : i32
    %c0_i32_0 = arith.constant 0 : i32
    return %arg0, %c0_i32 : i32, i32
  }
  func.func @transform_1(%arg0: i32, %arg1: i32) -> (i32, i32) {
    %c0_i32 = arith.constant 0 : i32
    %c0_i32_0 = arith.constant 0 : i32
    %c0_i32_1 = arith.constant 0 : i32
    return %c0_i32, %c0_i32_0 : i32, i32
  }
  func.func @transform_2(%arg0: i32, %arg1: i32) -> (i32, i32) {
    %c0_i32 = arith.constant 0 : i32
    %c0_i32_0 = arith.constant 0 : i32
    return %arg0, %c0_i32 : i32, i32
  }
  func.func @transform_3(%arg0: i32, %arg1: i32) -> (i32, i32) {
    %c0_i32 = arith.constant 0 : i32
    %c0_i32_0 = arith.constant 0 : i32
    return %c0_i32, %arg1 : i32, i32
  }
  func.func @transform_4(%arg0: i32, %arg1: i32) -> (i32, i32) {
    %c0_i32 = arith.constant 0 : i32
    %c0_i32_0 = arith.constant 0 : i32
    return %arg0, %c0_i32 : i32, i32
  }
}

</mosaic_0001>

<llo_original>
// kernel: tpu_custom_call.1
$region0: #{tpu_custom_call.1}
  #allocation0 [shape = 'u32[]', space=smem, size = 0x4, offset = 0x4, fixed_abs, tag = 'smem constant byte address 0x4 - core index']
  #allocation1 [shape = 'u32[72,128]{1,0:T(1,128)}', space=vmem, size = 0x9000, scoped, tag = 'internal scratch']
  #allocation2 [shape = 'bf16[16,128]{1,0:T(8,128)(2,1)}', space=vmem, size = 0x1000, scoped, tag = 'scratch operand']
  #allocation3 [shape = 'f32[16,1]{1,0:T(8,128)}', space=vmem, size = 0x2000, scoped, tag = 'scratch operand']
  #allocation4 [shape = 'f32[16,1]{1,0:T(8,128)}', space=vmem, size = 0x2000, scoped, tag = 'scratch operand']
  #allocation5 [shape = 'f32[16,1]{1,0:T(8,128)}', space=vmem, size = 0x2000, scoped, tag = 'scratch operand']
  #allocation6 [shape = 'f32[16,1]{1,0:T(8,128)}', space=vmem, size = 0x2000, scoped, tag = 'scratch operand']
  %s0 = inlined_call_operand.vmem [shape: bf16[128,128], index: 0, kind: input, shape index: {}]
  %s1 = inlined_call_operand.vmem [shape: bf16[128,128], index: 1, kind: input, shape index: {}]
  %s2 = inlined_call_operand.vmem [shape: s32[128,1], index: 2, kind: input, shape index: {}]
  %s3 = inlined_call_operand.vmem [shape: s32[1,128], index: 3, kind: input, shape index: {}]
  %s4 = inlined_call_operand.vmem [shape: f32[128,1], index: 4, kind: output, shape index: {}]
  %s5 = sld [smem:[#allocation0]]
  $region65: #{tpu_custom_call.1} parent=0
    _
  %s7 = ssub.s32 1, %s5
  %s8 = scalar_select 0, %s7, %s5
  loop: start=0, step=1, limit=10
  $region2: #{tpu_custom_call.1} parent=0 // loop_pre_header
    _
  $region3: #{tpu_custom_call.1} parent=0 // loop_header
    %s10 = sphi 0, %s14
    %p11 = scmp.ge.s32.totalorder %s10, 10
    %s17 = sphi 0, %s29
    %s18 = sphi 0, %s25
    %s19 = sphi 0, %s17
    %s20 = sphi 0, %s18
    %s21 = sphi 0, %s19
    %s22 = sphi 0, %s20
    %s32 = sphi 0, %s34
    %s35 = sphi 0, %s32
    %s36 = sphi 0, %s35
    %s52 = sphi 0, %s36
    %s56 = sphi 0, %s56
    %s58 = sphi 0, %s56
    %s59 = sphi 0, %s58
    %s73 = sphi 0, %s59
    %s79 = sphi 0, %s81
    %s82 = sphi 0, %s79
    %s83 = sphi 0, %s82
    %s99 = sphi 0, %s83
    %s105 = sphi 0, %s107
    %s108 = sphi 0, %s105
    %s109 = sphi 0, %s108
    %s125 = sphi 0, %s109
    %s131 = sphi 0, %s133
    %s134 = sphi 0, %s131
    %s135 = sphi 0, %s134
    %s151 = sphi 0, %s135
  $region4: #{tpu_custom_call.1} parent=0 // loop_header_branch
    %13 = sbr.rel (%p11) target = $region8
  $region5: #{tpu_custom_call.1} parent=0 // loop_body
    %s15 = ssub.s32 %s10, 1
    %s16 = ssub.s32 %s10, 2
    %s23 = sadd.s32 1, %s18
    %p24 = scmp.ge.s32.totalorder %s23, 1
    %s25 = scalar_select %p24, 0, %s23
    %s26 = sadd.s32 1, %s17
    %s27 = scalar_select %p24, %s26, %s17
    %p28 = scmp.ge.s32.totalorder %s27, 8
    %s29 = scalar_select %p28, 0, %s27
    %s30 = ssub.s32 %s17, %s29
    %p31 = scmp.eq.s32.totalorder %s30, 0
    %s33 = sadd.s32 %s32, 1
    %s34 = scalar_select %p31, %s32, %s33
    %p37 = pneg %p31
    %p38 = scmp.eq.s32.totalorder %s10, 7
    %p39 = por %p37, %p38
    %p40 = scmp.ne.s32.totalorder %s32, %s35
    %p41 = scmp.eq.s32.totalorder %s10, 0
    %p42 = por %p40, %p41
    %p43 = scmp.ne.s32.totalorder %s32, %s35
    %p44 = scmp.eq.s32.totalorder %s15, 7
    %p45 = por %p43, %p44
    %p46 = scmp.ne.s32.totalorder %s35, %s36
    %p47 = scmp.eq.s32.totalorder %s15, 0
    %p48 = por %p46, %p47
    %p49 = scmp.ne.s32.totalorder %s35, %s36
    %p50 = scmp.eq.s32.totalorder %s16, 7
    %p51 = por %p49, %p50
    %p53 = scmp.ne.s32.totalorder %s36, %s52
    %p54 = scmp.eq.s32.totalorder %s16, 0
    %p55 = por %p53, %p54
    %s57 = sadd.s32 %s56, 1
    %p60 = scmp.eq.s32.totalorder %s10, 7
    %p61 = scmp.ne.s32.totalorder %s56, %s58
    %p62 = scmp.eq.s32.totalorder %s10, 0
    %p63 = por %p61, %p62
    %p64 = scmp.ne.s32.totalorder %s56, %s58
    %p65 = scmp.eq.s32.totalorder %s15, 7
    %p66 = por %p64, %p65
    %p67 = scmp.ne.s32.totalorder %s58, %s59
    %p68 = scmp.eq.s32.totalorder %s15, 0
    %p69 = por %p67, %p68
    %p70 = scmp.ne.s32.totalorder %s58, %s59
    %p71 = scmp.eq.s32.totalorder %s16, 7
    %p72 = por %p70, %p71
    %p74 = scmp.ne.s32.totalorder %s59, %s73
    %p75 = scmp.eq.s32.totalorder %s16, 0
    %p76 = por %p74, %p75
    %s77 = ssub.s32 %s17, %s29
    %p78 = scmp.eq.s32.totalorder %s77, 0
    %s80 = sadd.s32 %s79, 1
    %s81 = scalar_select %p78, %s79, %s80
    %p84 = pneg %p78
    %p85 = scmp.eq.s32.totalorder %s10, 7
    %p86 = por %p84, %p85
    %p87 = scmp.ne.s32.totalorder %s79, %s82
    %p88 = scmp.eq.s32.totalorder %s10, 0
    %p89 = por %p87, %p88
    %p90 = scmp.ne.s32.totalorder %s79, %s82
    %p91 = scmp.eq.s32.totalorder %s15, 7
    %p92 = por %p90, %p91
    %p93 = scmp.ne.s32.totalorder %s82, %s83
    %p94 = scmp.eq.s32.totalorder %s15, 0
    %p95 = por %p93, %p94
    %p96 = scmp.ne.s32.totalorder %s82, %s83
    %p97 = scmp.eq.s32.totalorder %s16, 7
    %p98 = por %p96, %p97
    %p100 = scmp.ne.s32.totalorder %s83, %s99
    %p101 = scmp.eq.s32.totalorder %s16, 0
    %p102 = por %p100, %p101
    %s103 = ssub.s32 %s18, %s25
    %p104 = scmp.eq.s32.totalorder %s103, 0
    %s106 = sadd.s32 %s105, 1
    %s107 = scalar_select %p104, %s105, %s106
    %p110 = pneg %p104
    %p111 = scmp.eq.s32.totalorder %s10, 7
    %p112 = por %p110, %p111
    %p113 = scmp.ne.s32.totalorder %s105, %s108
    %p114 = scmp.eq.s32.totalorder %s10, 0
    %p115 = por %p113, %p114
    %p116 = scmp.ne.s32.totalorder %s105, %s108
    %p117 = scmp.eq.s32.totalorder %s15, 7
    %p118 = por %p116, %p117
    %p119 = scmp.ne.s32.totalorder %s108, %s109
    %p120 = scmp.eq.s32.totalorder %s15, 0
    %p121 = por %p119, %p120
    %p122 = scmp.ne.s32.totalorder %s108, %s109
    %p123 = scmp.eq.s32.totalorder %s16, 7
    %p124 = por %p122, %p123
    %p126 = scmp.ne.s32.totalorder %s109, %s125
    %p127 = scmp.eq.s32.totalorder %s16, 0
    %p128 = por %p126, %p127
    %s129 = ssub.s32 %s17, %s29
    %p130 = scmp.eq.s32.totalorder %s129, 0
    %s132 = sadd.s32 %s131, 1
    %s133 = scalar_select %p130, %s131, %s132
    %p136 = pneg %p130
    %p137 = scmp.eq.s32.totalorder %s10, 7
    %p138 = por %p136, %p137
    %p139 = scmp.ne.s32.totalorder %s131, %s134
    %p140 = scmp.eq.s32.totalorder %s10, 0
    %p141 = por %p139, %p140
    %p142 = scmp.ne.s32.totalorder %s131, %s134
    %p143 = scmp.eq.s32.totalorder %s15, 7
    %p144 = por %p142, %p143
    %p145 = scmp.ne.s32.totalorder %s134, %s135
    %p146 = scmp.eq.s32.totalorder %s15, 0
    %p147 = por %p145, %p146
    %p148 = scmp.ne.s32.totalorder %s134, %s135
    %p149 = scmp.eq.s32.totalorder %s16, 7
    %p150 = por %p148, %p149
    %p152 = scmp.ne.s32.totalorder %s135, %s151
    %p153 = scmp.eq.s32.totalorder %s16, 0
    %p154 = por %p152, %p153
    %p155 = scmp.le.s32.totalorder 1, %s10
    %p156 = scmp.lt.s32.totalorder %s10, 9
    %p157 = pnand %p155, %p156
    %p158 = pneg %p157
    // Predicated region
    $region9: #{tpu_custom_call.1} parent=5 // pred_check
      _
    $region10: #{tpu_custom_call.1} parent=5 // pred_check_branch
      %160 = sbr.rel (%p157) target = $region12
    $region11: #{tpu_custom_call.1} parent=5 // pred_region
      %s161 = ssub.s32 %s10, 1
      // Predicated region
      $region13: #{tpu_custom_call.1} parent=11 // pred_check
        %p162 = pneg %p69
      $region14: #{tpu_custom_call.1} parent=11 // pred_check_branch
        %164 = sbr.rel (%p162) target = $region16
      $region15: #{tpu_custom_call.1} parent=11 // pred_region
        _
      $region16: #{tpu_custom_call.1} parent=11 // pred_fallthru
        _
      // Predicated region
      $region17: #{tpu_custom_call.1} parent=11 // pred_check
        %p165 = pneg %p121
      $region18: #{tpu_custom_call.1} parent=11 // pred_check_branch
        %167 = sbr.rel (%p165) target = $region20
      $region19: #{tpu_custom_call.1} parent=11 // pred_region
        %p168 = scmp.lt.s32.totalorder %s20, 0
        %s169 = scalar_select %p168, %s20, 0
        %s170 = scalar_lea.vmem %s3, %s169
      $region20: #{tpu_custom_call.1} parent=11 // pred_fallthru
        _
    $region12: #{tpu_custom_call.1} parent=5 // pred_fallthru
      _
    %p171 = scmp.lt.s32.totalorder %s10, 8
    // Predicated region
    $region21: #{tpu_custom_call.1} parent=5 // pred_check
      %p172 = pneg %p171
    $region22: #{tpu_custom_call.1} parent=5 // pred_check_branch
      %174 = sbr.rel (%p172) target = $region24
    $region23: #{tpu_custom_call.1} parent=5 // pred_region
      // Predicated region
      $region25: #{tpu_custom_call.1} parent=23 // pred_check
        %p175 = pneg %p42
      $region26: #{tpu_custom_call.1} parent=23 // pred_check_branch
        %177 = sbr.rel (%p175) target = $region28
      $region27: #{tpu_custom_call.1} parent=23 // pred_region
        %s178 = smul.u32 2, %s17
        %p179 = scmp.lt.s32.totalorder %s178, 15
        %s180 = scalar_select %p179, %s178, 15
        %s181 = smul.addr %s180, 4
        %s182 = scalar_lea.vmem %s0, %s181
        %s183 = smul.u32 2, %s17
      $region28: #{tpu_custom_call.1} parent=23 // pred_fallthru
        _
      // Predicated region
      $region29: #{tpu_custom_call.1} parent=23 // pred_check
        %p184 = pneg %p89
      $region30: #{tpu_custom_call.1} parent=23 // pred_check_branch
        %186 = sbr.rel (%p184) target = $region32
      $region31: #{tpu_custom_call.1} parent=23 // pred_region
        %s187 = smul.u32 2, %s17
        %p188 = scmp.lt.s32.totalorder %s187, 15
        %s189 = scalar_select %p188, %s187, 15
        %s190 = smul.addr %s189, 8
        %s191 = scalar_lea.vmem %s2, %s190
        %s192 = smul.u32 2, %s17
      $region32: #{tpu_custom_call.1} parent=23 // pred_fallthru
        _
    $region24: #{tpu_custom_call.1} parent=5 // pred_fallthru
      _
    %p193 = scmp.le.s32.totalorder 1, %s10
    %p194 = scmp.lt.s32.totalorder %s10, 9
    %p195 = pnand %p193, %p194
    %p196 = pneg %p195
    // Predicated region
    $region33: #{tpu_custom_call.1} parent=5 // pred_check
      _
    $region34: #{tpu_custom_call.1} parent=5 // pred_check_branch
      %198 = sbr.rel (%p195) target = $region36
    $region35: #{tpu_custom_call.1} parent=5 // pred_region
      %s199 = ssub.s32 %s10, 1
      %s200 = smul.u32 2, %s19
      %p201 = scmp.lt.s32.totalorder %s200, 15
      %s202 = scalar_select %p201, %s200, 15
      %s203 = smul.addr %s202, 4
      %s204 = scalar_lea.vmem %s0, %s203
      %p205 = pneg %p48
      %p206 = pneg %p45
      %p207 = pneg %p69
      %p208 = pneg %p66
      %s209 = smul.u32 2, %s19
      %p210 = scmp.lt.s32.totalorder %s209, 15
      %s211 = scalar_select %p210, %s209, 15
      %s212 = smul.addr %s211, 8
      %s213 = scalar_lea.vmem %s2, %s212
      %p214 = pneg %p95
      %p215 = pneg %p92
      %p216 = scmp.lt.s32.totalorder %s20, 0
      %s217 = scalar_select %p216, %s20, 0
      %s218 = scalar_lea.vmem %s3, %s217
      %p219 = pneg %p121
      %p220 = pneg %p118
      %p221 = pneg %p147
      %p222 = pneg %p144
      %s223 = smul.u32 2, %s19
      %p224 = scmp.lt.s32.totalorder %s223, 15
      %s225 = scalar_select %p224, %s223, 15
      %s226 = smul.addr %s225, 8
      %s227 = scalar_lea.vmem %s4, %s226
      %s228 = smul.u32 2, %s19
      %p229 = scmp.lt.s32.totalorder %s228, 15
      %s230 = scalar_select %p229, %s228, 15
      %s231 = smul.addr %s230, 4
      %s232 = scalar_lea.vmem %s0, %s231
      %s233 = smul.u32 2, %s19
      %s234 = smul.u32 2, %s19
      %p235 = scmp.lt.s32.totalorder %s234, 15
      %s236 = scalar_select %p235, %s234, 15
      %s237 = smul.addr %s236, 8
      %s238 = scalar_lea.vmem %s2, %s237
      %s239 = smul.u32 2, %s19
      %p240 = scmp.lt.s32.totalorder %s20, 0
      %s241 = scalar_select %p240, %s20, 0
      %s242 = scalar_lea.vmem %s3, %s241
      %s243 = smul.u32 2, %s19
      %p244 = scmp.lt.s32.totalorder %s243, 15
      %s245 = scalar_select %p244, %s243, 15
      %s246 = smul.addr %s245, 8
      %s247 = scalar_lea.vmem %s4, %s246
      %s248 = smul.u32 2, %s19
      %p249 = scmp.eq.s32.totalorder %s20, 0
      // Predicated region
      $region37: #{tpu_custom_call.1} parent=35 // pred_check
        %p250 = pneg %p249
      $region38: #{tpu_custom_call.1} parent=35 // pred_check_branch
        %252 = sbr.rel (%p250) target = $region40
      $region39: #{tpu_custom_call.1} parent=35 // pred_region
        %v253 = vld [vmem:[%s232] sm:$0xf]
        %v254 = vld [vmem:[%s232 + $0x4] sm:$0xf]
        %v255 = vunpack.c.l.bf16 %v253
        %v256 = vunpack.c.l.bf16 %v254
        %v257 = vmul.f32 %v255, 14.285714
        %v258 = vmul.f32 %v256, 14.285714
        %v259 = vpack.c.bf16 %v257, %v257
        %v260 = vpack.c.bf16 %v258, %v258
        %261 = vst [vmem:[#allocation2] sm:$0xf] %v259
        %262 = vst [vmem:[#allocation2 + $0x4] sm:$0xf] %v260
        %vm263 = vcmask 7168
        %264 = vst.msk [vmem:[#allocation3] sm:$0xff] %vm263, -inf
        %265 = vst.msk [vmem:[#allocation3 + $0x8] sm:$0xff] %vm263, -inf
        %266 = vst.msk [vmem:[#allocation4] sm:$0xff] %vm263, 0.0
        %267 = vst.msk [vmem:[#allocation4 + $0x8] sm:$0xff] %vm263, 0.0
        %268 = vst.msk [vmem:[#allocation5] sm:$0xff] %vm263, 0.0
        %269 = vst.msk [vmem:[#allocation5 + $0x8] sm:$0xff] %vm263, 0.0
        %270 = vst.msk [vmem:[#allocation6] sm:$0xff] %vm263, 0.0
        %271 = vst.msk [vmem:[#allocation6 + $0x8] sm:$0xff] %vm263, 0.0
      $region40: #{tpu_custom_call.1} parent=35 // pred_fallthru
        _
      %s272 = smul.u32 %s20, 128
      %s273 = sshra.s32 %s272, 3
      %s274 = sand.u32 %s272, 7
      %s275 = smul.addr %s273, 4
      %s276 = scalar_lea.vmem %s1, %s275
      %v277 = vld [vmem:[%s276] sm:$0xf]
      %v278 = vld [vmem:[%s276 + $0x4] sm:$0xf]
      %v279 = vld [vmem:[%s276 + $0x8] sm:$0xf]
      %v280 = vld [vmem:[%s276 + $0xc] sm:$0xf]
      %v281 = vld [vmem:[%s276 + $0x10] sm:$0xf]
      %v282 = vld [vmem:[%s276 + $0x14] sm:$0xf]
      %v283 = vld [vmem:[%s276 + $0x18] sm:$0xf]
      %v284 = vld [vmem:[%s276 + $0x1c] sm:$0xf]
      %v285 = vld [vmem:[%s276 + $0x20] sm:$0xf]
      %v286 = vld [vmem:[%s276 + $0x24] sm:$0xf]
      %v287 = vld [vmem:[%s276 + $0x28] sm:$0xf]
      %v288 = vld [vmem:[%s276 + $0x2c] sm:$0xf]
      %v289 = vld [vmem:[%s276 + $0x30] sm:$0xf]
      %v290 = vld [vmem:[%s276 + $0x34] sm:$0xf]
      %v291 = vld [vmem:[%s276 + $0x38] sm:$0xf]
      %v292 = vld [vmem:[%s276 + $0x3c] sm:$0xf]
      %v293 = vld [vmem:[#allocation2] sm:$0xf]
      %v294 = vld [vmem:[#allocation2 + $0x4] sm:$0xf]
      %v297 = vunpack.c.l.b16 %v293
      %v298 = vunpack.c.l.b16 %v294
      %v299 = vpack.c.b16 %v298, %v297
      %v317 = vunpack.c.l.b16 %v277
      %v318 = vunpack.c.l.b16 %v278
      %v319 = vunpack.c.l.b16 %v279
      %v320 = vunpack.c.l.b16 %v280
      %v321 = vunpack.c.l.b16 %v281
      %v322 = vunpack.c.l.b16 %v282
      %v323 = vunpack.c.l.b16 %v283
      %v324 = vunpack.c.l.b16 %v284
      %v325 = vunpack.c.l.b16 %v285
      %v326 = vunpack.c.l.b16 %v286
      %v327 = vunpack.c.l.b16 %v287
      %v328 = vunpack.c.l.b16 %v288
      %v329 = vunpack.c.l.b16 %v289
      %v330 = vunpack.c.l.b16 %v290
      %v331 = vunpack.c.l.b16 %v291
      %v332 = vunpack.c.l.b16 %v292
      %v333 = vpack.c.b16 %v318, %v317
      %v334 = vpack.c.b16 %v320, %v319
      %v335 = vpack.c.b16 %v322, %v321
      %v336 = vpack.c.b16 %v324, %v323
      %v337 = vpack.c.b16 %v326, %v325
      %v338 = vpack.c.b16 %v328, %v327
      %v339 = vpack.c.b16 %v330, %v329
      %v340 = vpack.c.b16 %v332, %v331
      %349 = vmatpush.bf16.xpose.msra.mxu0 %v340
      %350 = vmatpush.bf16.xpose.msra.mxu0 %v339
      %351 = vmatpush.bf16.xpose.msra.mxu0 %v338
      %352 = vmatpush.bf16.xpose.msra.mxu0 %v337
      %353 = vmatpush.bf16.xpose.msra.mxu0 %v336
      %354 = vmatpush.bf16.xpose.msra.mxu0 %v335
      %355 = vmatpush.bf16.xpose.msra.mxu0 %v334
      %356 = vmatpush.bf16.xpose.msra.mxu0 %v333
      %357 = vmatmul.bf16.gmra.mxu0 %v299
      %v358 = vpop.f32.mrf.mxu0
      %v359 = vadd.f32 0.0, %v358
      %v360 = vpop.f32.mrf.mxu0
      %v361 = vadd.f32 0.0, %v360
      %362 = vdwg.mxu0
      %v363 = vld [vmem:[%s238] sm:$0xff]
      %v364 = vld [vmem:[%s238 + $0x8] sm:$0xff]
      %v365 = vld [vmem:[%s242] sm:$0x1]
      %366 = vset.pattern.permute.xlu0 0
      %367 = vperm.xlu0 %366, %v363
      %v368 = vpop.permute.xlu0 %367
      %369 = vset.pattern.permute.xlu0 0
      %370 = vperm.xlu0 %369, %v364
      %v371 = vpop.permute.xlu0 %370
      %v372 = vperm.slane %v365, 0
      %vm373 = vcmp.eq.s32.totalorder %v368, %v372
      %vm374 = vcmp.eq.s32.totalorder %v371, %v372
      %v375 = vld [vmem:[#allocation3] sm:$0xff]
      %v376 = vld [vmem:[#allocation3 + $0x8] sm:$0xff]
      %377 = vmax.xlane.f32.xlu0 %v359
      %v378 = vpop.xlane.xlu0 %377
      %379 = vmax.xlane.f32.xlu0 %v361
      %v380 = vpop.xlane.xlu0 %379
      %v381 = vmax.f32 %v375, %v378
      %v382 = vmax.f32 %v376, %v380
      %v383 = vsub.f32 %v375, %v381
      %v384 = vsub.f32 %v376, %v382
      %v385 = vmul.f32 %v383, 1.442695
      %v386 = vpow.pop %v385
      %v387 = vmul.f32 %v384, 1.442695
      %v388 = vpow.pop %v387
      %vm389 = vcmask 7168
      %390 = vst.msk [vmem:[#allocation3] sm:$0xff] %vm389, %v381
      %391 = vst.msk [vmem:[#allocation3 + $0x8] sm:$0xff] %vm389, %v382
      %s392 = smul.u32 %s19, 16
      %s393 = sadd.s32 %s392, 16
      %p394 = scmp.lt.s32.totalorder %s272, %s393
      %s395 = sadd.s32 %s20, 1
      %s396 = smul.u32 %s395, 128
      %p397 = scmp.lt.s32.totalorder %s392, %s396
      %p398 = pnand %p394, %p397
      %p399 = pneg %p398
      %p400 = scmp.gt.s32.totalorder %s396, 16
      %p401 = por %p399, %p400
      // Predicated region
      $region41: #{tpu_custom_call.1} parent=35 // pred_check
        %p402 = pneg %p401
      $region42: #{tpu_custom_call.1} parent=35 // pred_check_branch
        %404 = sbr.rel (%p402) target = $region44
      $region43: #{tpu_custom_call.1} parent=35 // pred_region
        %v405 = vlaneseq
        %v406 = vshrl.u32 %v405, 7
        %v407 = vadd.s32 %v406, 8
        %v408 = vstv %s392
        %v409 = vadd.s32 %v408, %v406
        %v410 = vadd.s32 %v408, %v407
        %v411 = vlaneseq
        %v412 = vand.u32 %v411, 127
        %v413 = vstv %s272
        %v414 = vadd.s32 %v413, %v412
        %vm415 = vcmp.ne.s32.totalorder %v409, %v414
        %vm416 = vcmp.ne.s32.totalorder %v410, %v414
        %vm417 = vcmp.lt.s32.totalorder %v414, 16
        %v418 = vsel %vm417, 1, 0
        %vm419 = vcmp.eq.s32.totalorder %v418, 1
        %vm420 = vmand %vm415, %vm419
        %vm421 = vmand %vm416, %vm419
        %423 = vset.pattern.permute.xlu0 0
        %424 = vperm.xlu0 %423, %v381
        %v425 = vpop.permute.xlu0 %424
        %428 = vset.pattern.permute.xlu0 0
        %429 = vperm.xlu0 %428, %v382
        %v430 = vpop.permute.xlu0 %429
        %v432 = vsub.f32 %v359, %v425
        %v433 = vsub.f32 %v361, %v430
        %v434 = vmul.f32 %v432, 1.442695
        %v435 = vpow.pop %v434
        %v436 = vmul.f32 %v433, 1.442695
        %v437 = vpow.pop %v436
        %v438 = vsel %vm420, %v435, 0.0
        %v439 = vsel %vm421, %v437, 0.0
        %v440 = vld [vmem:[#allocation4] sm:$0xff]
        %v441 = vld [vmem:[#allocation4 + $0x8] sm:$0xff]
        %v442 = vmul.f32 %v386, %v440
        %v443 = vmul.f32 %v388, %v441
        %444 = vadd.xlane.f32.xlu0 %v438
        %v445 = vpop.xlane.xlu0 %444
        %446 = vadd.xlane.f32.xlu0 %v439
        %v447 = vpop.xlane.xlu0 %446
        %v448 = vadd.f32 %v442, %v445
        %v449 = vadd.f32 %v443, %v447
        %450 = vst.msk [vmem:[#allocation4] sm:$0xff] %vm389, %v448
        %451 = vst.msk [vmem:[#allocation4 + $0x8] sm:$0xff] %vm389, %v449
        %vm452 = vmand %vm373, %vm420
        %vm453 = vmand %vm374, %vm421
        %v454 = vld [vmem:[#allocation5] sm:$0xff]
        %v455 = vld [vmem:[#allocation5 + $0x8] sm:$0xff]
        %v456 = vsel %vm452, %v359, 0.0
        %v457 = vsel %vm453, %v361, 0.0
        %458 = vadd.xlane.f32.xlu0 %v456
        %v459 = vpop.xlane.xlu0 %458
        %460 = vadd.xlane.f32.xlu0 %v457
        %v461 = vpop.xlane.xlu0 %460
        %v462 = vadd.f32 %v454, %v459
        %v463 = vadd.f32 %v455, %v461
        %464 = vst.msk [vmem:[#allocation5] sm:$0xff] %vm389, %v462
        %465 = vst.msk [vmem:[#allocation5 + $0x8] sm:$0xff] %vm389, %v463
        %v466 = vld [vmem:[#allocation6] sm:$0xff]
        %v467 = vld [vmem:[#allocation6 + $0x8] sm:$0xff]
        %v468 = vsel %vm452, 1.0, 0.0
        %v469 = vsel %vm453, 1.0, 0.0
        %470 = vadd.xlane.f32.xlu0 %v468
        %v471 = vpop.xlane.xlu0 %470
        %472 = vadd.xlane.f32.xlu0 %v469
        %v473 = vpop.xlane.xlu0 %472
        %v474 = vadd.f32 %v466, %v471
        %v475 = vadd.f32 %v467, %v473
        %476 = vst.msk [vmem:[#allocation6] sm:$0xff] %vm389, %v474
        %477 = vst.msk [vmem:[#allocation6 + $0x8] sm:$0xff] %vm389, %v475
      $region44: #{tpu_custom_call.1} parent=35 // pred_fallthru
        _
      %p478 = pneg %p401
      // Predicated region
      $region45: #{tpu_custom_call.1} parent=35 // pred_check
        _
      $region46: #{tpu_custom_call.1} parent=35 // pred_check_branch
        %480 = sbr.rel (%p401) target = $region48
      $region47: #{tpu_custom_call.1} parent=35 // pred_region
        %482 = vset.pattern.permute.xlu0 0
        %483 = vperm.xlu0 %482, %v381
        %v484 = vpop.permute.xlu0 %483
        %487 = vset.pattern.permute.xlu0 0
        %488 = vperm.xlu0 %487, %v382
        %v489 = vpop.permute.xlu0 %488
        %v491 = vsub.f32 %v359, %v484
        %v492 = vsub.f32 %v361, %v489
        %v493 = vmul.f32 %v491, 1.442695
        %v494 = vpow.pop %v493
        %v495 = vmul.f32 %v492, 1.442695
        %v496 = vpow.pop %v495
        %v497 = vld [vmem:[#allocation4] sm:$0xff]
        %v498 = vld [vmem:[#allocation4 + $0x8] sm:$0xff]
        %v499 = vmul.f32 %v386, %v497
        %v500 = vmul.f32 %v388, %v498
        %501 = vadd.xlane.f32.xlu0 %v494
        %v502 = vpop.xlane.xlu0 %501
        %503 = vadd.xlane.f32.xlu0 %v496
        %v504 = vpop.xlane.xlu0 %503
        %v505 = vadd.f32 %v499, %v502
        %v506 = vadd.f32 %v500, %v504
        %507 = vst.msk [vmem:[#allocation4] sm:$0xff] %vm389, %v505
        %508 = vst.msk [vmem:[#allocation4 + $0x8] sm:$0xff] %vm389, %v506
        %v509 = vld [vmem:[#allocation5] sm:$0xff]
        %v510 = vld [vmem:[#allocation5 + $0x8] sm:$0xff]
        %v511 = vsel %vm373, %v359, 0.0
        %v512 = vsel %vm374, %v361, 0.0
        %513 = vadd.xlane.f32.xlu0 %v511
        %v514 = vpop.xlane.xlu0 %513
        %515 = vadd.xlane.f32.xlu0 %v512
        %v516 = vpop.xlane.xlu0 %515
        %v517 = vadd.f32 %v509, %v514
        %v518 = vadd.f32 %v510, %v516
        %519 = vst.msk [vmem:[#allocation5] sm:$0xff] %vm389, %v517
        %520 = vst.msk [vmem:[#allocation5 + $0x8] sm:$0xff] %vm389, %v518
        %v521 = vld [vmem:[#allocation6] sm:$0xff]
        %v522 = vld [vmem:[#allocation6 + $0x8] sm:$0xff]
        %v523 = vsel %vm373, 1.0, 0.0
        %v524 = vsel %vm374, 1.0, 0.0
        %525 = vadd.xlane.f32.xlu0 %v523
        %v526 = vpop.xlane.xlu0 %525
        %527 = vadd.xlane.f32.xlu0 %v524
        %v528 = vpop.xlane.xlu0 %527
        %v529 = vadd.f32 %v521, %v526
        %v530 = vadd.f32 %v522, %v528
        %531 = vst.msk [vmem:[#allocation6] sm:$0xff] %vm389, %v529
        %532 = vst.msk [vmem:[#allocation6 + $0x8] sm:$0xff] %vm389, %v530
      $region48: #{tpu_custom_call.1} parent=35 // pred_fallthru
        _
      // Predicated region
      $region49: #{tpu_custom_call.1} parent=35 // pred_check
        %p533 = pneg %p249
      $region50: #{tpu_custom_call.1} parent=35 // pred_check_branch
        %535 = sbr.rel (%p533) target = $region52
      $region51: #{tpu_custom_call.1} parent=35 // pred_region
        %v536 = vld [vmem:[#allocation3] sm:$0xff]
        %v537 = vld [vmem:[#allocation3 + $0x8] sm:$0xff]
        %v538 = vld [vmem:[#allocation4] sm:$0xff]
        %v539 = vld [vmem:[#allocation4 + $0x8] sm:$0xff]
        %v540 = vlog2.pop %v538
        %v541 = vmul.f32 %v540, 0.6931472
        %v542 = vlog2.pop %v539
        %v543 = vmul.f32 %v542, 0.6931472
        %v544 = vadd.f32 %v536, %v541
        %v545 = vadd.f32 %v537, %v543
        %v546 = vld [vmem:[#allocation6] sm:$0xff]
        %v547 = vld [vmem:[#allocation6 + $0x8] sm:$0xff]
        %v548 = vld [vmem:[#allocation5] sm:$0xff]
        %v549 = vld [vmem:[#allocation5 + $0x8] sm:$0xff]
        %v550 = vrcp.pop %v546
        %v551 = vmul.f32 %v546, %v550
        %v552 = vsub.f32 1.0, %v551
        %v553 = vmul.f32 %v550, %v552
        %v554 = vadd.f32 %v550, %v553
        %vm555 = vweird.f32 %v546
        %vm556 = vweird.f32 %v550
        %vm557 = vmor %vm555, %vm556
        %v558 = vsel %vm557, %v550, %v554
        %v559 = vand.u32 2147483647, %v546
        %vm560 = vcmp.eq.f32.partialorder %v559, 8.507059e+37
        %v561 = vand.u32 %v546, 2147483648
        %v562 = vor.u32 1.1754944e-38, %v561
        %v563 = vsel %vm560, %v562, %v558
        %v564 = vmul.f32 %v548, %v563
        %v565 = vrcp.pop %v547
        %v566 = vmul.f32 %v547, %v565
        %v567 = vsub.f32 1.0, %v566
        %v568 = vmul.f32 %v565, %v567
        %v569 = vadd.f32 %v565, %v568
        %vm570 = vweird.f32 %v547
        %vm571 = vweird.f32 %v565
        %vm572 = vmor %vm570, %vm571
        %v573 = vsel %vm572, %v565, %v569
        %v574 = vand.u32 2147483647, %v547
        %vm575 = vcmp.eq.f32.partialorder %v574, 8.507059e+37
        %v576 = vand.u32 %v547, 2147483648
        %v577 = vor.u32 1.1754944e-38, %v576
        %v578 = vsel %vm575, %v577, %v573
        %v579 = vmul.f32 %v549, %v578
        %v580 = vsub.f32 %v564, %v544
        %v581 = vsub.f32 %v579, %v545
        %v582 = vmul.f32 %v580, -1.0
        %v583 = vmul.f32 %v581, -1.0
        %584 = vst.msk [vmem:[%s247] sm:$0xff] %vm389, %v582
        %585 = vst.msk [vmem:[%s247 + $0x8] sm:$0xff] %vm389, %v583
      $region52: #{tpu_custom_call.1} parent=35 // pred_fallthru
        _
      %s586 = smul.u32 2, %s19
      %p587 = scmp.lt.s32.totalorder %s586, 15
      %s588 = scalar_select %p587, %s586, 15
      %s589 = smul.addr %s588, 8
      %s590 = scalar_lea.vmem %s4, %s589
      // Predicated region
      $region53: #{tpu_custom_call.1} parent=35 // pred_check
        %p591 = pneg %p144
      $region54: #{tpu_custom_call.1} parent=35 // pred_check_branch
        %593 = sbr.rel (%p591) target = $region56
      $region55: #{tpu_custom_call.1} parent=35 // pred_region
        %s594 = smul.u32 2, %s19
      $region56: #{tpu_custom_call.1} parent=35 // pred_fallthru
        _
    $region36: #{tpu_custom_call.1} parent=5 // pred_fallthru
      _
    %p595 = scmp.le.s32.totalorder 2, %s10
    // Predicated region
    $region57: #{tpu_custom_call.1} parent=5 // pred_check
      %p596 = pneg %p595
    $region58: #{tpu_custom_call.1} parent=5 // pred_check_branch
      %598 = sbr.rel (%p596) target = $region60
    $region59: #{tpu_custom_call.1} parent=5 // pred_region
      %s599 = ssub.s32 %s10, 2
      // Predicated region
      $region61: #{tpu_custom_call.1} parent=59 // pred_check
        %p600 = pneg %p150
      $region62: #{tpu_custom_call.1} parent=59 // pred_check_branch
        %602 = sbr.rel (%p600) target = $region64
      $region63: #{tpu_custom_call.1} parent=59 // pred_region
        %s603 = smul.u32 2, %s21
        %p604 = scmp.lt.s32.totalorder %s603, 15
        %s605 = scalar_select %p604, %s603, 15
        %s606 = smul.addr %s605, 8
        %s607 = scalar_lea.vmem %s4, %s606
      $region64: #{tpu_custom_call.1} parent=59 // pred_fallthru
        _
    $region60: #{tpu_custom_call.1} parent=5 // pred_fallthru
      _
  $region6: #{tpu_custom_call.1} parent=0 // loop_footer
    %s14 = sadd.s32 1, %s10
  $region7: #{tpu_custom_call.1} parent=0 // loop_footer_branch
    %9 = sbr.rel target = $region3
  $region8: #{tpu_custom_call.1} parent=0 // loop_exit
    _

</llo_original>
